<compile_context>
chip_gen: v7x
topology: tpu7x:2x2x1
jax: 0.10.0
libtpu: 0.0.40
codegen_flags: <defaults>
</compile_context>

<pallas_src>
import functools

import jax
import jax.numpy as jnp
import numpy as np
from jax import lax
from jax.experimental import pallas as pl
from jax.experimental.pallas import tpu as pltpu


def _down_kernel(x_ref, w1_ref, w2_ref, o_ref, pooled_ref, y1_ref,
                 *, B, Hp, Wp, Cin):
    """One batch block per grid step: 2x2 maxpool + two block-Toeplitz conv matmuls."""
    WCin = Wp * Cin
    R = B * Hp                       # pooled rows in this block (flat index b*Hp + h)

    # ---- MaxPool 2x2 stride 2: two wide vector maxes, no loops -------------------
    # H direction: even rows vs odd rows of the flat (B*H, W*Cin) input block.
    hm = jnp.maximum(x_ref[pl.ds(0, R, 2)], x_ref[pl.ds(1, R, 2)])      # (R, W*Cin)
    # W direction: the wrapper de-interleaved the columns (even cols | odd cols), so
    # one max of the two lane halves gives the compact (R, Wp*Cin) pooled image.
    pooled_ref[...] = jnp.maximum(hm[:, :WCin], hm[:, WCin:])

    # ---- conv1 + ReLU: 3 dy-shifted row views, one block-Toeplitz matmul ---------
    # dx taps are folded into w1_ref; its columns for invalid output positions are
    # zero, so y1 columns j >= Wp-2 are exactly 0 after ReLU (no garbage columns).
    M1 = R - 2
    lhs1 = jnp.concatenate([pooled_ref[pl.ds(dy, M1)] for dy in range(3)], axis=-1)
    y1_ref[...] = jnp.maximum(
        jnp.dot(lhs1, w1_ref[...], preferred_element_type=jnp.float32), 0.0)

    # ---- conv2 + ReLU -------------------------------------------------------------
    M2 = R - 4
    lhs2 = jnp.concatenate([y1_ref[pl.ds(dy, M2)] for dy in range(3)], axis=-1)
    y2 = jnp.maximum(
        jnp.dot(lhs2, w2_ref[...], preferred_element_type=jnp.float32), 0.0)

    # One lane-dense store of the whole block; wrapper crops width / gathers rows.
    o_ref[0] = y2.astype(o_ref.dtype)


def _toeplitz_weight(w_hwio, Wp, w_valid):
    """HWIO (3,3,Ci,Co) -> block-Toeplitz (3*Wp*Ci, Wp*Co), folding the dx taps.

    Row index (dy*Wp + jin)*Ci + ci ; column index jout*Co + co.
    Columns with jout >= w_valid are all-zero so invalid output columns come out 0.
    """
    kh, kw, ci, co = w_hwio.shape
    sel = np.zeros((kw, Wp, Wp), np.float32)          # (dx, jin, jout)
    for dx in range(kw):
        for jout in range(w_valid):
            sel[dx, jout + dx, jout] = 1.0
    wt = jnp.einsum("xnj,yxio->ynijo", jnp.asarray(sel), w_hwio.astype(jnp.float32))
    return wt.reshape(kh * Wp * ci, Wp * co)


def _pick_grid(N, H):
    """Pick (grid_len, batch_block). Prefer an even grid length >= 2 (v7x has two
    TensorCores) while folding as much batch as possible into each step to fatten
    the matmul M dimension. Falls back to a single full-batch step (always legal)."""
    for g in (2, 4, 8):
        if N % g == 0 and N // g >= 1 and ((N // g) * H) % 8 == 0:
            return g, N // g
    return 1, N


def down_forward(x_nchw, w1_hwio, w2_hwio):
    """Pallas implementation of Down.forward (PyTorch NCHW in / NCHW out)."""
    N, Cin, H, W = x_nchw.shape
    Cout = w1_hwio.shape[-1]
    assert H % 2 == 0 and W % 2 == 0, "Down requires even H and W"
    Hp, Wp = H // 2, W // 2
    H2, W2 = Hp - 4, Wp - 4          # maxpool then two valid 3x3 convs
    assert H2 >= 1 and W2 >= 1, "pooled image too small for two valid 3x3 convs"

    G, B = _pick_grid(N, H)
    M2 = B * Hp - 4                  # conv2 rows emitted per grid step

    # NCHW -> NHWC, de-interleave W (even cols | odd cols) so the W-direction pool is
    # a single lane-half max in the kernel, then flatten to (N*H, W*Cin).
    x_nhwc = jnp.transpose(x_nchw, (0, 2, 3, 1)).astype(jnp.float32)
    x_de = jnp.concatenate([x_nhwc[:, :, 0::2, :], x_nhwc[:, :, 1::2, :]], axis=2)
    x_flat = x_de.reshape(N * H, W * Cin)

    # Host-side block-Toeplitz weights (hoisted layout work, tiny: ~24 KB / ~48 KB).
    w1_toe = _toeplitz_weight(w1_hwio, Wp, Wp - 2)    # (3*Wp*Cin,  Wp*Cout)
    w2_toe = _toeplitz_weight(w2_hwio, Wp, Wp - 4)    # (3*Wp*Cout, Wp*Cout)

    kernel = functools.partial(_down_kernel, B=B, Hp=Hp, Wp=Wp, Cin=Cin)

    out = pl.pallas_call(
        kernel,
        out_shape=jax.ShapeDtypeStruct((G, M2, Wp * Cout), jnp.float32),
        grid_spec=pltpu.PrefetchScalarGridSpec(
            num_scalar_prefetch=0,
            grid=(G,),
            in_specs=[
                pl.BlockSpec((B * H, W * Cin), lambda n: (n, 0)),
                pl.BlockSpec((3 * Wp * Cin, Wp * Cout), lambda n: (0, 0)),
                pl.BlockSpec((3 * Wp * Cout, Wp * Cout), lambda n: (0, 0)),
            ],
            out_specs=pl.BlockSpec((1, M2, Wp * Cout), lambda n: (n, 0, 0)),
            scratch_shapes=[
                pltpu.VMEM((B * Hp, Wp * Cin), jnp.float32),       # pooled image
                pltpu.VMEM((B * Hp - 2, Wp * Cout), jnp.float32),  # conv1 output
            ],
        ),
        compiler_params=pltpu.CompilerParams(
            dimension_semantics=("parallel",)),
    )(x_flat, w1_toe, w2_toe)

    # Gather the valid rows (drops cross-image rows when B > 1; identity when B == 1),
    # crop the padded width, and go back to NCHW.
    row_idx = np.asarray([b * Hp + h for b in range(B) for h in range(H2)], np.int32)
    out = jnp.take(out, jnp.asarray(row_idx), axis=1)         # (G, B*H2, Wp*Cout)
    out = out.reshape(N, H2, Wp, Cout)[:, :, :W2, :]
    return jnp.transpose(out, (0, 3, 1, 2))


def down_reference(x_nchw, w1_hwio, w2_hwio):
    """Pure-JAX reference matching PyTorch semantics."""
    p = lax.reduce_window(x_nchw, -jnp.inf, lax.max,
                          window_dimensions=(1, 1, 2, 2),
                          window_strides=(1, 1, 2, 2),
                          padding="VALID")
    dn = ("NCHW", "HWIO", "NCHW")
    y = lax.conv_general_dilated(p, w1_hwio, (1, 1), "VALID", dimension_numbers=dn)
    y = jnp.maximum(y, 0.0)
    y = lax.conv_general_dilated(y, w2_hwio, (1, 1), "VALID", dimension_numbers=dn)
    return jnp.maximum(y, 0.0)


if __name__ == "__main__":
    # Small shapes consistent with Down(in_channels=4, out_channels=8)
    N, Cin, H, W = 2, 4, 16, 16
    Cout = 8

    key = jax.random.PRNGKey(0)
    kx, kw1, kw2 = jax.random.split(key, 3)
    x = jax.random.normal(kx, (N, Cin, H, W), dtype=jnp.float32)
    # Deterministic synthetic weights (HWIO), roughly Kaiming-scaled.
    w1 = jax.random.normal(kw1, (3, 3, Cin, Cout), dtype=jnp.float32) * (2.0 / (9 * Cin)) ** 0.5
    w2 = jax.random.normal(kw2, (3, 3, Cout, Cout), dtype=jnp.float32) * (2.0 / (9 * Cout)) ** 0.5

    out = down_forward(x, w1, w2)
    out = jax.block_until_ready(out)

    ref = jax.block_until_ready(down_reference(x, w1, w2))
    assert out.shape == (N, Cout, H // 2 - 4, W // 2 - 4), out.shape
    np.testing.assert_allclose(np.asarray(out), np.asarray(ref), rtol=1e-4, atol=1e-4)

    print("KERNEL_OK")
</pallas_src>

<mosaic_0001>
module attributes {stable_mosaic.version = 11 : i64} {
  func.func @_down_kernel(%arg0: i32, %arg1: memref<16x64xf32, #tpu.memory_space<vmem>>, %arg2: memref<96x64xf32, #tpu.memory_space<vmem>>, %arg3: memref<192x64xf32, #tpu.memory_space<vmem>>, %arg4: memref<1x4x64xf32, #tpu.memory_space<vmem>>, %arg5: memref<8x32xf32, #tpu.memory_space<vmem>>, %arg6: memref<6x64xf32, #tpu.memory_space<vmem>>) attributes {dimension_semantics = [#tpu.dimension_semantics<parallel>], iteration_bounds = array<i64: 2>, scalar_prefetch = 0 : i64, scratch_operands = 2 : i64, tpu.core_type = #tpu.core_type<tc>, window_params = [{transform_indices = @transform_0, window_bounds = array<i64: 16, 64>}, {pipeline_mode = #tpu.pipeline_mode<synchronous>, transform_indices = @transform_1, window_bounds = array<i64: 96, 64>}, {pipeline_mode = #tpu.pipeline_mode<synchronous>, transform_indices = @transform_2, window_bounds = array<i64: 192, 64>}, {transform_indices = @transform_3, window_bounds = array<i64: 1, 4, 64>}]} {
    %c0 = arith.constant 0 : index
    %c0_0 = arith.constant 0 : index
    %0 = tpu.strided_load %arg1[%c0, %c0_0] {strides = array<i32: 2, 1>} : memref<16x64xf32, #tpu.memory_space<vmem>>, vector<8x64xf32>
    %c1 = arith.constant 1 : index
    %c0_1 = arith.constant 0 : index
    %1 = tpu.strided_load %arg1[%c1, %c0_1] {strides = array<i32: 2, 1>} : memref<16x64xf32, #tpu.memory_space<vmem>>, vector<8x64xf32>
    %2 = arith.maximumf %0, %1 : vector<8x64xf32>
    %3 = vector.extract_strided_slice %2 {offsets = [0, 0], sizes = [8, 32], strides = [1, 1]} : vector<8x64xf32> to vector<8x32xf32>
    %4 = vector.extract_strided_slice %2 {offsets = [0, 32], sizes = [8, 32], strides = [1, 1]} : vector<8x64xf32> to vector<8x32xf32>
    %5 = arith.maximumf %3, %4 : vector<8x32xf32>
    %c0_2 = arith.constant 0 : index
    %c0_3 = arith.constant 0 : index
    %6 = vector.load %arg5[%c0_2, %c0_3] : memref<8x32xf32, #tpu.memory_space<vmem>>, vector<8x32xf32>
    tpu.vector_store %arg5[%c0_2, %c0_3], %5 {strides = array<i32>} : memref<8x32xf32, #tpu.memory_space<vmem>>, vector<8x32xf32>,
    %c0_4 = arith.constant 0 : index
    %c0_5 = arith.constant 0 : index
    %7 = vector.load %arg5[%c0_4, %c0_5] : memref<8x32xf32, #tpu.memory_space<vmem>>, vector<6x32xf32>
    %c1_6 = arith.constant 1 : index
    %c0_7 = arith.constant 0 : index
    %8 = vector.load %arg5[%c1_6, %c0_7] : memref<8x32xf32, #tpu.memory_space<vmem>>, vector<6x32xf32>
    %c2 = arith.constant 2 : index
    %c0_8 = arith.constant 0 : index
    %9 = vector.load %arg5[%c2, %c0_8] : memref<8x32xf32, #tpu.memory_space<vmem>>, vector<6x32xf32>
    %10 = tpu.concatenate %7, %8, %9 in 1 : vector<6x32xf32>, vector<6x32xf32>, vector<6x32xf32> -> vector<6x96xf32>
    %c0_9 = arith.constant 0 : index
    %c0_10 = arith.constant 0 : index
    %11 = vector.load %arg2[%c0_9, %c0_10] : memref<96x64xf32, #tpu.memory_space<vmem>>, vector<96x64xf32>
    %cst = arith.constant dense<0.000000e+00> : vector<6x64xf32>
    %12 = tpu.matmul %10, %11, %cst {dimension_numbers = #tpu.dot_dimension_numbers<[1], [0], [0], [1], [0, 0, 1, 1], [], []>} : vector<6x96xf32>, vector<96x64xf32>, vector<6x64xf32> -> vector<6x64xf32>
    %cst_11 = arith.constant 0.000000e+00 : f32
    %13 = vector.broadcast %cst_11 : f32 to vector<6x64xf32>
    %14 = arith.maximumf %12, %13 : vector<6x64xf32>
    %c0_12 = arith.constant 0 : index
    %c0_13 = arith.constant 0 : index
    %15 = vector.load %arg6[%c0_12, %c0_13] : memref<6x64xf32, #tpu.memory_space<vmem>>, vector<6x64xf32>
    tpu.vector_store %arg6[%c0_12, %c0_13], %14 {strides = array<i32>} : memref<6x64xf32, #tpu.memory_space<vmem>>, vector<6x64xf32>,
    %c0_14 = arith.constant 0 : index
    %c0_15 = arith.constant 0 : index
    %16 = vector.load %arg6[%c0_14, %c0_15] : memref<6x64xf32, #tpu.memory_space<vmem>>, vector<4x64xf32>
    %c1_16 = arith.constant 1 : index
    %c0_17 = arith.constant 0 : index
    %17 = vector.load %arg6[%c1_16, %c0_17] : memref<6x64xf32, #tpu.memory_space<vmem>>, vector<4x64xf32>
    %c2_18 = arith.constant 2 : index
    %c0_19 = arith.constant 0 : index
    %18 = vector.load %arg6[%c2_18, %c0_19] : memref<6x64xf32, #tpu.memory_space<vmem>>, vector<4x64xf32>
    %19 = tpu.concatenate %16, %17, %18 in 1 : vector<4x64xf32>, vector<4x64xf32>, vector<4x64xf32> -> vector<4x192xf32>
    %c0_20 = arith.constant 0 : index
    %c0_21 = arith.constant 0 : index
    %20 = vector.load %arg3[%c0_20, %c0_21] : memref<192x64xf32, #tpu.memory_space<vmem>>, vector<192x64xf32>
    %cst_22 = arith.constant dense<0.000000e+00> : vector<4x64xf32>
    %21 = tpu.matmul %19, %20, %cst_22 {dimension_numbers = #tpu.dot_dimension_numbers<[1], [0], [0], [1], [0, 0, 1, 1], [], []>} : vector<4x192xf32>, vector<192x64xf32>, vector<4x64xf32> -> vector<4x64xf32>
    %cst_23 = arith.constant 0.000000e+00 : f32
    %22 = vector.broadcast %cst_23 : f32 to vector<4x64xf32>
    %23 = arith.maximumf %21, %22 : vector<4x64xf32>
    %c0_24 = arith.constant 0 : index
    %c0_25 = arith.constant 0 : index
    %c0_26 = arith.constant 0 : index
    %24 = vector.load %arg4[%c0_24, %c0_25, %c0_26] : memref<1x4x64xf32, #tpu.memory_space<vmem>>, vector<1x4x64xf32>
    %25 = vector.shape_cast %24 : vector<1x4x64xf32> to vector<4x64xf32>
    %26 = vector.shape_cast %23 : vector<4x64xf32> to vector<1x4x64xf32>
    tpu.vector_store %arg4[%c0_24, %c0_25, %c0_26], %26 {strides = array<i32>} : memref<1x4x64xf32, #tpu.memory_space<vmem>>, vector<1x4x64xf32>,
    return
  }
  func.func @transform_0(%arg0: i32) -> (i32, i32) {
    %c0_i32 = arith.constant 0 : i32
    %c0_i32_0 = arith.constant 0 : i32
    return %arg0, %c0_i32 : i32, i32
  }
  func.func @transform_1(%arg0: i32) -> (i32, i32) {
    %c0_i32 = arith.constant 0 : i32
    %c0_i32_0 = arith.constant 0 : i32
    %c0_i32_1 = arith.constant 0 : i32
    return %c0_i32, %c0_i32_0 : i32, i32
  }
  func.func @transform_2(%arg0: i32) -> (i32, i32) {
    %c0_i32 = arith.constant 0 : i32
    %c0_i32_0 = arith.constant 0 : i32
    %c0_i32_1 = arith.constant 0 : i32
    return %c0_i32, %c0_i32_0 : i32, i32
  }
  func.func @transform_3(%arg0: i32) -> (i32, i32, i32) {
    %c0_i32 = arith.constant 0 : i32
    %c0_i32_0 = arith.constant 0 : i32
    %c0_i32_1 = arith.constant 0 : i32
    return %arg0, %c0_i32, %c0_i32_0 : i32, i32, i32
  }
}

</mosaic_0001>

<llo_original>
// kernel: tpu_custom_call.1
$region0: #{tpu_custom_call.1}
  #allocation0 [shape = 'u32[]', space=smem, size = 0x4, offset = 0x4, fixed_abs, tag = 'smem constant byte address 0x4 - core index']
  #allocation1 [shape = 'u32[144,128]{1,0:T(1,128)}', space=vmem, size = 0x12000, scoped, tag = 'internal scratch']
  #allocation2 [shape = 'f32[8,32]{1,0:T(8,128)}', space=vmem, size = 0x1000, scoped, tag = 'scratch operand']
  #allocation3 [shape = 'f32[6,64]{1,0:T(8,128)}', space=vmem, size = 0x1000, scoped, tag = 'scratch operand']
  %s0 = inlined_call_operand.vmem [shape: f32[32,64], index: 0, kind: input, shape index: {}]
  %s1 = inlined_call_operand.vmem [shape: f32[96,64], index: 1, kind: input, shape index: {}]
  %s2 = inlined_call_operand.vmem [shape: f32[192,64], index: 2, kind: input, shape index: {}]
  %s3 = inlined_call_operand.hbm [shape: f32[2,4,64], index: 3, kind: output, shape index: {}]
  %s4 = sld [smem:[#allocation0]]
  $region45: #{tpu_custom_call.1} parent=0
    _
  %s6 = ssub.s32 1, %s4
  %s7 = scalar_select 0, %s6, %s4
  $region1: #{tpu_custom_call.1} parent=0
    #allocation4 [shape = 'u8[4096]{0}', space=vmem, size = 0x1000, scoped, tag = 'output window, operand 0']
    #allocation5 [shape = 's32[2]{0}', space=sflag, size = 0x8, scoped, tag = 'scoped memory for tpu_custom_call.1']
    %8 = vsyncpa [#allocation5], 0
    %s9 = scalar_lea.sflag [#allocation5], 1
    %10 = vsyncpa %s9, 0
    loop: start=0, step=1, limit=4
    $region2: #{tpu_custom_call.1} parent=1 // loop_pre_header
      _
    $region3: #{tpu_custom_call.1} parent=1 // loop_header
      %s12 = sphi 0, %s16
      %p13 = scmp.ge.s32.totalorder %s12, 4
      %s22 = sphi 0, %s24
      %s25 = sphi 0, %s22
      %s26 = sphi 0, %s25
      %s42 = sphi 0, %s26
      %s46 = sphi 0, %s46
      %s48 = sphi 0, %s46
      %s49 = sphi 0, %s48
      %s63 = sphi 0, %s49
      %s67 = sphi 0, %s67
      %s69 = sphi 0, %s67
      %s70 = sphi 0, %s69
      %s84 = sphi 0, %s70
      %s90 = sphi 0, %s92
      %s93 = sphi 0, %s90
      %s94 = sphi 0, %s93
      %s110 = sphi 0, %s94
    $region4: #{tpu_custom_call.1} parent=1 // loop_header_branch
      %15 = sbr.rel (%p13) target = $region8
    $region5: #{tpu_custom_call.1} parent=1 // loop_body
      %s17 = ssub.s32 %s12, 1
      %s18 = ssub.s32 %s12, 2
      %s19 = sadd.s32 %s12, 1
      %s20 = ssub.s32 %s12, %s19
      %p21 = scmp.eq.s32.totalorder %s20, 0
      %s23 = sadd.s32 %s22, 1
      %s24 = scalar_select %p21, %s22, %s23
      %p27 = pneg %p21
      %p28 = scmp.eq.s32.totalorder %s12, 1
      %p29 = por %p27, %p28
      %p30 = scmp.ne.s32.totalorder %s22, %s25
      %p31 = scmp.eq.s32.totalorder %s12, 0
      %p32 = por %p30, %p31
      %p33 = scmp.ne.s32.totalorder %s22, %s25
      %p34 = scmp.eq.s32.totalorder %s17, 1
      %p35 = por %p33, %p34
      %p36 = scmp.ne.s32.totalorder %s25, %s26
      %p37 = scmp.eq.s32.totalorder %s17, 0
      %p38 = por %p36, %p37
      %p39 = scmp.ne.s32.totalorder %s25, %s26
      %p40 = scmp.eq.s32.totalorder %s18, 1
      %p41 = por %p39, %p40
      %p43 = scmp.ne.s32.totalorder %s26, %s42
      %p44 = scmp.eq.s32.totalorder %s18, 0
      %p45 = por %p43, %p44
      %s47 = sadd.s32 %s46, 1
      %p50 = scmp.eq.s32.totalorder %s12, 1
      %p51 = scmp.ne.s32.totalorder %s46, %s48
      %p52 = scmp.eq.s32.totalorder %s12, 0
      %p53 = por %p51, %p52
      %p54 = scmp.ne.s32.totalorder %s46, %s48
      %p55 = scmp.eq.s32.totalorder %s17, 1
      %p56 = por %p54, %p55
      %p57 = scmp.ne.s32.totalorder %s48, %s49
      %p58 = scmp.eq.s32.totalorder %s17, 0
      %p59 = por %p57, %p58
      %p60 = scmp.ne.s32.totalorder %s48, %s49
      %p61 = scmp.eq.s32.totalorder %s18, 1
      %p62 = por %p60, %p61
      %p64 = scmp.ne.s32.totalorder %s49, %s63
      %p65 = scmp.eq.s32.totalorder %s18, 0
      %p66 = por %p64, %p65
      %s68 = sadd.s32 %s67, 1
      %p71 = scmp.eq.s32.totalorder %s12, 1
      %p72 = scmp.ne.s32.totalorder %s67, %s69
      %p73 = scmp.eq.s32.totalorder %s12, 0
      %p74 = por %p72, %p73
      %p75 = scmp.ne.s32.totalorder %s67, %s69
      %p76 = scmp.eq.s32.totalorder %s17, 1
      %p77 = por %p75, %p76
      %p78 = scmp.ne.s32.totalorder %s69, %s70
      %p79 = scmp.eq.s32.totalorder %s17, 0
      %p80 = por %p78, %p79
      %p81 = scmp.ne.s32.totalorder %s69, %s70
      %p82 = scmp.eq.s32.totalorder %s18, 1
      %p83 = por %p81, %p82
      %p85 = scmp.ne.s32.totalorder %s70, %s84
      %p86 = scmp.eq.s32.totalorder %s18, 0
      %p87 = por %p85, %p86
      %s88 = ssub.s32 %s12, %s19
      %p89 = scmp.eq.s32.totalorder %s88, 0
      %s91 = sadd.s32 %s90, 1
      %s92 = scalar_select %p89, %s90, %s91
      %p95 = pneg %p89
      %p96 = scmp.eq.s32.totalorder %s12, 1
      %p97 = por %p95, %p96
      %p98 = scmp.ne.s32.totalorder %s90, %s93
      %p99 = scmp.eq.s32.totalorder %s12, 0
      %p100 = por %p98, %p99
      %p101 = scmp.ne.s32.totalorder %s90, %s93
      %p102 = scmp.eq.s32.totalorder %s17, 1
      %p103 = por %p101, %p102
      %p104 = scmp.ne.s32.totalorder %s93, %s94
      %p105 = scmp.eq.s32.totalorder %s17, 0
      %p106 = por %p104, %p105
      %p107 = scmp.ne.s32.totalorder %s93, %s94
      %p108 = scmp.eq.s32.totalorder %s18, 1
      %p109 = por %p107, %p108
      %p111 = scmp.ne.s32.totalorder %s94, %s110
      %p112 = scmp.eq.s32.totalorder %s18, 0
      %p113 = por %p111, %p112
      %p114 = scmp.le.s32.totalorder 1, %s12
      %p115 = scmp.lt.s32.totalorder %s12, 3
      %p116 = pnand %p114, %p115
      %p117 = pneg %p116
      // Predicated region
      $region9: #{tpu_custom_call.1} parent=5 // pred_check
        _
      $region10: #{tpu_custom_call.1} parent=5 // pred_check_branch
        %119 = sbr.rel (%p116) target = $region12
      $region11: #{tpu_custom_call.1} parent=5 // pred_region
        %s120 = ssub.s32 %s12, 1
        // Predicated region
        $region13: #{tpu_custom_call.1} parent=11 // pred_check
          %p121 = pneg %p59
        $region14: #{tpu_custom_call.1} parent=11 // pred_check_branch
          %123 = sbr.rel (%p121) target = $region16
        $region15: #{tpu_custom_call.1} parent=11 // pred_region
          _
        $region16: #{tpu_custom_call.1} parent=11 // pred_fallthru
          _
        // Predicated region
        $region17: #{tpu_custom_call.1} parent=11 // pred_check
          %p124 = pneg %p80
        $region18: #{tpu_custom_call.1} parent=11 // pred_check_branch
          %126 = sbr.rel (%p124) target = $region20
        $region19: #{tpu_custom_call.1} parent=11 // pred_region
          _
        $region20: #{tpu_custom_call.1} parent=11 // pred_fallthru
          _
      $region12: #{tpu_custom_call.1} parent=5 // pred_fallthru
        _
      %p127 = scmp.lt.s32.totalorder %s12, 2
      // Predicated region
      $region21: #{tpu_custom_call.1} parent=5 // pred_check
        %p128 = pneg %p127
      $region22: #{tpu_custom_call.1} parent=5 // pred_check_branch
        %130 = sbr.rel (%p128) target = $region24
      $region23: #{tpu_custom_call.1} parent=5 // pred_region
        // Predicated region
        $region25: #{tpu_custom_call.1} parent=23 // pred_check
          %p131 = pneg %p32
        $region26: #{tpu_custom_call.1} parent=23 // pred_check_branch
          %133 = sbr.rel (%p131) target = $region28
        $region27: #{tpu_custom_call.1} parent=23 // pred_region
          %s134 = smul.u32 2, %s12
          %p135 = scmp.lt.s32.totalorder %s134, 3
          %s136 = scalar_select %p135, %s134, 3
          %s137 = smul.addr %s136, 8
          %s138 = scalar_lea.vmem %s0, %s137
          %s139 = smul.u32 2, %s12
        $region28: #{tpu_custom_call.1} parent=23 // pred_fallthru
          _
      $region24: #{tpu_custom_call.1} parent=5 // pred_fallthru
        _
      %p140 = scmp.le.s32.totalorder 1, %s12
      %p141 = scmp.lt.s32.totalorder %s12, 3
      %p142 = pnand %p140, %p141
      %p143 = pneg %p142
      // Predicated region
      $region29: #{tpu_custom_call.1} parent=5 // pred_check
        _
      $region30: #{tpu_custom_call.1} parent=5 // pred_check_branch
        %145 = sbr.rel (%p142) target = $region32
      $region31: #{tpu_custom_call.1} parent=5 // pred_region
        %s146 = ssub.s32 %s12, 1
        %s147 = smul.u32 2, %s17
        %p148 = scmp.lt.s32.totalorder %s147, 3
        %s149 = scalar_select %p148, %s147, 3
        %s150 = smul.addr %s149, 8
        %s151 = scalar_lea.vmem %s0, %s150
        %p152 = pneg %p38
        %p153 = pneg %p35
        %p154 = pneg %p59
        %p155 = pneg %p56
        %p156 = pneg %p80
        %p157 = pneg %p77
        %p158 = pneg %p106
        %p159 = pneg %p103
        %s160 = sand.u32 %s93, 1
        %s161 = scalar_lea.sflag [#allocation5], %s160
        %s162 = sand.u32 %s93, 1
        %s163 = smul.addr %s162, 4
        %s164 = scalar_lea.vmem [#allocation4], %s163
        %s165 = smul.u32 2, %s17
        %p166 = scmp.lt.s32.totalorder %s165, 3
        %s167 = scalar_select %p166, %s165, 3
        %s168 = smul.addr %s167, 8
        %s169 = scalar_lea.vmem %s0, %s168
        %s170 = smul.u32 2, %s17
        %v171 = vld [vmem:[%s169] ss:$2 sm:$0xff]
        %s172 = scalar_lea.vmem %s169, 1
        %v173 = vld [vmem:[%s172] ss:$2 sm:$0xff]
        %v174 = vmax.f32 %v171, %v173
        %176 = vrot.lane.b32.xlu0 %v174, 96
        %v177 = vpop.permute.xlu0 %176
        %v179 = vmax.f32 %v174, %v177
        %vm180 = vcmask 261120
        %181 = vst.msk [vmem:[#allocation2] sm:$0xff] %vm180, %v179
        %v182 = vld [vmem:[#allocation2] sm:$0x3f]
        %v183 = vld [vmem:[#allocation2 + $0x1] sm:$0x3f]
        %v184 = vld [vmem:[#allocation2 + $0x2] sm:$0x3f]
        %186 = vrot.lane.b32.xlu0 %v183, 32
        %v187 = vpop.permute.xlu0 %186
        %190 = vrot.lane.b32.xlu0 %v184, 64
        %v191 = vpop.permute.xlu0 %190
        %v193 = vsel %vm180, %v182, %v187
        %vm194 = vcmask 523264
        %v195 = vsel %vm194, %v193, %v191
        %v196 = vld [vmem:[%s1] sm:$0xff]
        %v197 = vld [vmem:[%s1 + $0x8] sm:$0xff]
        %v198 = vld [vmem:[%s1 + $0x10] sm:$0xff]
        %v199 = vld [vmem:[%s1 + $0x18] sm:$0xff]
        %v200 = vld [vmem:[%s1 + $0x20] sm:$0xff]
        %v201 = vld [vmem:[%s1 + $0x28] sm:$0xff]
        %v202 = vld [vmem:[%s1 + $0x30] sm:$0xff]
        %v203 = vld [vmem:[%s1 + $0x38] sm:$0xff]
        %v204 = vld [vmem:[%s1 + $0x40] sm:$0xff]
        %v205 = vld [vmem:[%s1 + $0x48] sm:$0xff]
        %v206 = vld [vmem:[%s1 + $0x50] sm:$0xff]
        %v207 = vld [vmem:[%s1 + $0x58] sm:$0xff]
        %vm208 = vcmask 785408
        %v210 = vsel %vm208, %v195, 0
        %212 = vmatprep.subr.mxu0 0.0
        %213 = vmatpush1.msra.mxu0 %v196
        %214 = vmatprep.subr.mxu0 0.0
        %215 = vmatpush1.msra.mxu0 %v197
        %216 = vmatprep.subr.mxu0 0.0
        %217 = vmatpush1.msra.mxu0 %v198
        %218 = vmatprep.subr.mxu0 0.0
        %219 = vmatpush1.msra.mxu0 %v199
        %220 = vmatprep.subr.mxu0 0.0
        %221 = vmatpush1.msra.mxu0 %v200
        %222 = vmatprep.subr.mxu0 0.0
        %223 = vmatpush1.msra.mxu0 %v201
        %224 = vmatprep.subr.mxu0 0.0
        %225 = vmatpush1.msra.mxu0 %v202
        %226 = vmatprep.subr.mxu0 0.0
        %227 = vmatpush1.msra.mxu0 %v203
        %228 = vmatprep.subr.mxu0 0.0
        %229 = vmatpush1.msra.mxu0 %v204
        %230 = vmatprep.subr.mxu0 0.0
        %231 = vmatpush1.msra.mxu0 %v205
        %232 = vmatprep.subr.mxu0 0.0
        %233 = vmatpush1.msra.mxu0 %v206
        %234 = vmatprep.subr.mxu0 0.0
        %235 = vmatpush1.msra.mxu0 %v207
        %236 = vmatprep.subr.mxu0 0.0
        %237 = vmatpush1.msra.mxu0 0.0
        %238 = vmatprep.subr.mxu0 0.0
        %239 = vmatpush1.msra.mxu0 0.0
        %240 = vmatprep.subr.mxu0 0.0
        %241 = vmatpush1.msra.mxu0 0.0
        %242 = vmatprep.subr.mxu0 0.0
        %243 = vmatpush1.msra.mxu0 0.0
        %244 = vmatprep.subr.mxu0 0.0
        %245 = vmatpush1.msra.mxu0 0.0
        %246 = vmatprep.subr.mxu0 0.0
        %247 = vmatpush1.msra.mxu0 0.0
        %248 = vmatprep.subr.mxu0 0.0
        %249 = vmatpush1.msra.mxu0 0.0
        %250 = vmatprep.subr.mxu0 0.0
        %251 = vmatpush1.msra.mxu0 0.0
        %252 = vmatprep.subr.mxu0 0.0
        %253 = vmatpush1.msra.mxu0 0.0
        %254 = vmatprep.subr.mxu0 0.0
        %255 = vmatpush1.msra.mxu0 0.0
        %256 = vmatprep.subr.mxu0 0.0
        %257 = vmatpush1.msra.mxu0 0.0
        %258 = vmatprep.subr.mxu0 0.0
        %259 = vmatpush1.msra.mxu0 0.0
        %260 = vmatprep.subr.mxu0 0.0
        %261 = vmatpush1.msra.mxu0 0.0
        %262 = vmatprep.subr.mxu0 0.0
        %263 = vmatpush1.msra.mxu0 0.0
        %264 = vmatprep.subr.mxu0 0.0
        %265 = vmatpush1.msra.mxu0 0.0
        %266 = vmatprep.subr.mxu0 0.0
        %267 = vmatpush1.msra.mxu0 0.0
        %268 = vmatprep.subr.mxu0 0.0
        %269 = vmatpush1.msra.mxu0 0.0
        %270 = vmatprep.subr.mxu0 0.0
        %271 = vmatpush1.msra.mxu0 0.0
        %272 = vmatprep.subr.mxu0 0.0
        %273 = vmatpush1.msra.mxu0 0.0
        %274 = vmatprep.subr.mxu0 0.0
        %275 = vmatpush1.msra.mxu0 0.0
        %276 = vmatprep.mubr.f32.mxu0 0.0
        %277 = vmatmul.mubr.f32.gmra.mrb[0].mxu0 %v210
        %v278 = vpop.f32.mrb[0].mxu0
        %v279 = vadd.f32 0.0, %v278
        %v280 = vpop.f32.mrb[0].mxu0
        %281 = vdwg.mxu0
        %v282 = vmax.f32 %v279, 0.0
        %vm283 = vcmask 521216
        %284 = vst.msk [vmem:[#allocation3] sm:$0x3f] %vm283, %v282
        %v285 = vld [vmem:[#allocation3] sm:$0xf]
        %v286 = vld [vmem:[#allocation3 + $0x1] sm:$0xf]
        %v287 = vld [vmem:[#allocation3 + $0x2] sm:$0xf]
        %289 = vrot.lane.b32.xlu0 %v286, 64
        %v290 = vpop.permute.xlu0 %289
        %v292 = vsel %vm194, %v285, %v290
        %v293 = vld [vmem:[%s2] sm:$0xff]
        %v294 = vld [vmem:[%s2 + $0x8] sm:$0xff]
        %v295 = vld [vmem:[%s2 + $0x10] sm:$0xff]
        %v296 = vld [vmem:[%s2 + $0x18] sm:$0xff]
        %v297 = vld [vmem:[%s2 + $0x20] sm:$0xff]
        %v298 = vld [vmem:[%s2 + $0x28] sm:$0xff]
        %v299 = vld [vmem:[%s2 + $0x30] sm:$0xff]
        %v300 = vld [vmem:[%s2 + $0x38] sm:$0xff]
        %v301 = vld [vmem:[%s2 + $0x40] sm:$0xff]
        %v302 = vld [vmem:[%s2 + $0x48] sm:$0xff]
        %v303 = vld [vmem:[%s2 + $0x50] sm:$0xff]
        %v304 = vld [vmem:[%s2 + $0x58] sm:$0xff]
        %v305 = vld [vmem:[%s2 + $0x60] sm:$0xff]
        %v306 = vld [vmem:[%s2 + $0x68] sm:$0xff]
        %v307 = vld [vmem:[%s2 + $0x70] sm:$0xff]
        %v308 = vld [vmem:[%s2 + $0x78] sm:$0xff]
        %v309 = vld [vmem:[%s2 + $0x80] sm:$0xff]
        %v310 = vld [vmem:[%s2 + $0x88] sm:$0xff]
        %v311 = vld [vmem:[%s2 + $0x90] sm:$0xff]
        %v312 = vld [vmem:[%s2 + $0x98] sm:$0xff]
        %v313 = vld [vmem:[%s2 + $0xa0] sm:$0xff]
        %v314 = vld [vmem:[%s2 + $0xa8] sm:$0xff]
        %v315 = vld [vmem:[%s2 + $0xb0] sm:$0xff]
        %v316 = vld [vmem:[%s2 + $0xb8] sm:$0xff]
        %v318 = vsel %vm194, %v287, 0
        %320 = vmatprep.subr.mxu0 0.0
        %321 = vmatpush1.msra.mxu0 %v293
        %322 = vmatprep.subr.mxu0 0.0
        %323 = vmatpush1.msra.mxu0 %v294
        %324 = vmatprep.subr.mxu0 0.0
        %325 = vmatpush1.msra.mxu0 %v295
        %326 = vmatprep.subr.mxu0 0.0
        %327 = vmatpush1.msra.mxu0 %v296
        %328 = vmatprep.subr.mxu0 0.0
        %329 = vmatpush1.msra.mxu0 %v297
        %330 = vmatprep.subr.mxu0 0.0
        %331 = vmatpush1.msra.mxu0 %v298
        %332 = vmatprep.subr.mxu0 0.0
        %333 = vmatpush1.msra.mxu0 %v299
        %334 = vmatprep.subr.mxu0 0.0
        %335 = vmatpush1.msra.mxu0 %v300
        %336 = vmatprep.subr.mxu0 0.0
        %337 = vmatpush1.msra.mxu0 %v301
        %338 = vmatprep.subr.mxu0 0.0
        %339 = vmatpush1.msra.mxu0 %v302
        %340 = vmatprep.subr.mxu0 0.0
        %341 = vmatpush1.msra.mxu0 %v303
        %342 = vmatprep.subr.mxu0 0.0
        %343 = vmatpush1.msra.mxu0 %v304
        %344 = vmatprep.subr.mxu0 0.0
        %345 = vmatpush1.msra.mxu0 %v305
        %346 = vmatprep.subr.mxu0 0.0
        %347 = vmatpush1.msra.mxu0 %v306
        %348 = vmatprep.subr.mxu0 0.0
        %349 = vmatpush1.msra.mxu0 %v307
        %350 = vmatprep.subr.mxu0 0.0
        %351 = vmatpush1.msra.mxu0 %v308
        %352 = vmatprep.subr.mxu0 0.0
        %353 = vmatpush1.msra.mxu0 %v309
        %354 = vmatprep.subr.mxu0 0.0
        %355 = vmatpush1.msra.mxu0 %v310
        %356 = vmatprep.subr.mxu0 0.0
        %357 = vmatpush1.msra.mxu0 %v311
        %358 = vmatprep.subr.mxu0 0.0
        %359 = vmatpush1.msra.mxu0 %v312
        %360 = vmatprep.subr.mxu0 0.0
        %361 = vmatpush1.msra.mxu0 %v313
        %362 = vmatprep.subr.mxu0 0.0
        %363 = vmatpush1.msra.mxu0 %v314
        %364 = vmatprep.subr.mxu0 0.0
        %365 = vmatpush1.msra.mxu0 %v315
        %366 = vmatprep.subr.mxu0 0.0
        %367 = vmatpush1.msra.mxu0 %v316
        %368 = vmatprep.subr.mxu0 0.0
        %369 = vmatpush1.msra.mxu0 0.0
        %370 = vmatprep.subr.mxu0 0.0
        %371 = vmatpush1.msra.mxu0 0.0
        %372 = vmatprep.subr.mxu0 0.0
        %373 = vmatpush1.msra.mxu0 0.0
        %374 = vmatprep.subr.mxu0 0.0
        %375 = vmatpush1.msra.mxu0 0.0
        %376 = vmatprep.subr.mxu0 0.0
        %377 = vmatpush1.msra.mxu0 0.0
        %378 = vmatprep.subr.mxu0 0.0
        %379 = vmatpush1.msra.mxu0 0.0
        %380 = vmatprep.subr.mxu0 0.0
        %381 = vmatpush1.msra.mxu0 0.0
        %382 = vmatprep.subr.mxu0 0.0
        %383 = vmatpush1.msra.mxu0 0.0
        %384 = vmatprep.mubr.f32.mxu0 %v318
        %385 = vmatmul.mubr.f32.gmra.mrb[0].mxu0 %v292
        %v386 = vpop.f32.mrb[0].mxu0
        %v387 = vadd.f32 0.0, %v386
        %v388 = vpop.f32.mrb[0].mxu0
        %389 = vdwg.mxu0
        %v390 = vmax.f32 %v387, 0.0
        %vm391 = vcmask 519168
        %392 = vst.msk [vmem:[%s164] sm:$0xf] %vm391, %v390
        %s393 = sand.u32 %s93, 1
        %s394 = scalar_lea.sflag [#allocation5], %s393
        %s395 = sand.u32 %s93, 1
        %s396 = smul.addr %s395, 4
        %s397 = scalar_lea.vmem [#allocation4], %s396
        // Predicated region
        $region33: #{tpu_custom_call.1} parent=31 // pred_check
          %p398 = pneg %p103
        $region34: #{tpu_custom_call.1} parent=31 // pred_check_branch
          %400 = sbr.rel (%p398) target = $region36
        $region35: #{tpu_custom_call.1} parent=31 // pred_region
          %s402 = ssub.s32 64, 64
          %403 = vsyncadd %s394, %s402
          %s404 = smul.addr %s17, 64
          %s405 = scalar_lea.hbm %s3, %s404
          %s407 = sshll.u32 %s397, 4
          %s408 = int_to_ptr.vmem [resolvable:$true] %s407
          %410 = dma.vmem_to_hbm [thread:$0]  %s408, 64, %s405, %s394
        $region36: #{tpu_custom_call.1} parent=31 // pred_fallthru
          _
      $region32: #{tpu_custom_call.1} parent=5 // pred_fallthru
        _
      %p411 = scmp.le.s32.totalorder 2, %s12
      // Predicated region
      $region37: #{tpu_custom_call.1} parent=5 // pred_check
        %p412 = pneg %p411
      $region38: #{tpu_custom_call.1} parent=5 // pred_check_branch
        %414 = sbr.rel (%p412) target = $region40
      $region39: #{tpu_custom_call.1} parent=5 // pred_region
        %s415 = ssub.s32 %s12, 2
        // Predicated region
        $region41: #{tpu_custom_call.1} parent=39 // pred_check
          %p416 = pneg %p109
        $region42: #{tpu_custom_call.1} parent=39 // pred_check_branch
          %418 = sbr.rel (%p416) target = $region44
        $region43: #{tpu_custom_call.1} parent=39 // pred_region
          %s419 = sand.u32 %s94, 1
          %s420 = scalar_lea.sflag [#allocation5], %s419
          %s421 = sand.u32 %s94, 1
          %s422 = smul.addr %s421, 4
          %s423 = scalar_lea.vmem [#allocation4], %s422
          %424 = dma.done %s420, 64
        $region44: #{tpu_custom_call.1} parent=39 // pred_fallthru
          _
      $region40: #{tpu_custom_call.1} parent=5 // pred_fallthru
        _
    $region6: #{tpu_custom_call.1} parent=1 // loop_footer
      %s16 = sadd.s32 1, %s12
    $region7: #{tpu_custom_call.1} parent=1 // loop_footer_branch
      %11 = sbr.rel target = $region3
    $region8: #{tpu_custom_call.1} parent=1 // loop_exit
      _
    %425 = vsyncpa [#allocation5], 1
    %s426 = scalar_lea.sflag [#allocation5], 1
    %427 = vsyncpa %s426, 1

</llo_original>
